<compile_context>
chip_gen: v7x
topology: tpu7x:2x2x1
jax: 0.10.0
libtpu: 0.0.40
codegen_flags: <defaults>
</compile_context>

<pallas_src>
import functools

import jax
import jax.numpy as jnp
from jax import lax
from jax.experimental import pallas as pl
from jax.experimental.pallas import tpu as pltpu


def _round_up(x, m):
    return ((x + m - 1) // m) * m


def gaussian_policy_kernel(obs_ref, noise_ref, w1_ref, b1_ref, w2_ref, b2_ref,
                           std_raw_ref, eye_ref, out_ref, *,
                           gate_output: bool, learn_std: bool):
    # Row-major input tiles straight from HBM; everything downstream is
    # feature-major so the output store is lane-dense.
    obs = obs_ref[...]                        # [TB, S]  (storage dtype -> MXU)
    noise = noise_ref[...]                    # [TB, A]
    w1 = w1_ref[...]                          # [H, S]
    w2 = w2_ref[...]                          # [A, H]
    b1 = b1_ref[...].astype(jnp.float32)      # [H, 1]
    b2 = b2_ref[...].astype(jnp.float32)      # [A, 1]

    # --- mean network: Linear -> tanh -> Linear ---------------------------
    # einsum('hs,bs->hb'): contract the feature axis of the row-major obs tile;
    # the result is already feature-major [H, TB].  f32 accumulation on MXU.
    h = lax.dot_general(w1, obs.astype(w1.dtype),
                        dimension_numbers=(((1,), (1,)), ((), ())),
                        preferred_element_type=jnp.float32)          # [H, TB]
    h = jnp.tanh(h + b1)                                             # f32 VPU/EUP
    # TODO(synk): at very large TB, chunk this dot over the lane axis
    # (lax.fori_loop(..., unroll=True)) to keep h in vregs; low priority (mem-bound).
    mean = jnp.dot(w2, h.astype(w2.dtype),
                   preferred_element_type=jnp.float32)               # [A, TB]
    mean = mean + b2
    if gate_output:
        mean = jnp.tanh(mean)

    # --- std --------------------------------------------------------------
    std_raw = std_raw_ref[...].astype(jnp.float32)                   # [A, 1]
    if learn_std:
        std = jnp.maximum(jnp.logaddexp(std_raw, 0.0), 1e-6)         # softplus, clamp
    else:
        std = std_raw

    # Scale + transpose the row-major noise tile in one tiny MXU op:
    #   diag(std) [A,A] @ noise^T  ==  std[:,None] * noise.T   -> [A, TB]
    # (MXU has huge slack; avoids both a wrapper transpose and an XLU transpose.)
    std_diag = (eye_ref[...] * std).astype(noise.dtype)              # [A, A]
    noise_t = lax.dot_general(std_diag, noise,
                              dimension_numbers=(((1,), (1,)), ((), ())),
                              preferred_element_type=jnp.float32)    # [A, TB]

    # Lane-dense store: last dim is the batch tile (multiple of 128 lanes).
    out_ref[...] = (mean + noise_t).astype(out_ref.dtype)


def gaussian_policy_forward(obs, noise, params, gate_output=False,
                            learn_std=True, max_batch_tile=16384):
    """obs: [B, state_dim], noise: [B, action_dim] -> action: [B, action_dim]."""
    w1, b1, w2, b2, std_raw = params          # torch nn.Linear layout: [out, in]
    B, S = obs.shape
    A = w2.shape[0]
    assert noise.shape == (B, A)

    # Lane-dense (>=128) batch tile, capped for v7x's smaller VMEM, and sized so
    # big batches keep >=2..8 grid steps (v7x megacore via "parallel").
    tb = max(128, min(max_batch_tile, _round_up(pl.cdiv(B, 8), 128)))
    grid = (pl.cdiv(B, tb),)                  # ragged final block handled by Pallas

    eye_a = jnp.eye(A, dtype=jnp.float32)     # tiny resident constant for diag(std)
    const = lambda arr: pl.BlockSpec(arr.shape, lambda i: (0, 0))  # VMEM-resident

    kernel = functools.partial(gaussian_policy_kernel,
                               gate_output=gate_output, learn_std=learn_std)

    out_t = pl.pallas_call(
        kernel,
        out_shape=jax.ShapeDtypeStruct((A, B), obs.dtype),
        grid=grid,
        in_specs=[
            pl.BlockSpec((tb, S), lambda i: (i, 0)),   # obs tiles, row-major
            pl.BlockSpec((tb, A), lambda i: (i, 0)),   # noise tiles, row-major
            const(w1), const(b1), const(w2), const(b2),
            const(std_raw), const(eye_a),
        ],
        out_specs=pl.BlockSpec((A, tb), lambda i: (0, i)),   # feature-major out
        compiler_params=pltpu.CompilerParams(
            dimension_semantics=("parallel",)),        # shard batch over 2 TCs (v7x)
    )(obs, noise, w1, b1, w2, b2, std_raw, eye_a)

    # Cheapest re-layout lives outside the kernel (out is the smallest array).
    return out_t.T


def init_params(key, state_dim, hidden_dim, action_dim, dtype=jnp.float32):
    # PyTorch nn.Linear layout [out_features, in_features]; biases zero;
    # _std parameter = zeros(action_dim) matching nn.Parameter(torch.zeros(A)).
    k1, k2 = jax.random.split(key)
    w1 = (jax.random.normal(k1, (hidden_dim, state_dim), jnp.float32)
          / jnp.sqrt(state_dim)).astype(dtype)
    b1 = jnp.zeros((hidden_dim, 1), dtype)
    w2 = (jax.random.normal(k2, (action_dim, hidden_dim), jnp.float32)
          / jnp.sqrt(hidden_dim)).astype(dtype)
    b2 = jnp.zeros((action_dim, 1), dtype)
    std_raw = jnp.zeros((action_dim, 1), dtype)
    return (w1, b1, w2, b2, std_raw)


def reference_forward(obs, noise, params, gate_output=False):
    w1, b1, w2, b2, std_raw = params
    f32 = lambda x: x.astype(jnp.float32)
    h = jnp.tanh(f32(obs) @ f32(w1).T + f32(b1)[:, 0])
    mean = h @ f32(w2).T + f32(b2)[:, 0]
    if gate_output:
        mean = jnp.tanh(mean)
    std = jnp.maximum(jax.nn.softplus(f32(std_raw)[:, 0]), 1e-6)
    return mean + f32(noise) * std


if __name__ == "__main__":
    STATE_DIM, HIDDEN, ACTION_DIM = 16, 32, 8

    key = jax.random.PRNGKey(0)
    k_obs, k_noise, k_params = jax.random.split(key, 3)
    params = init_params(k_params, STATE_DIM, HIDDEN, ACTION_DIM)

    # 1) Small batch (B=8): single (partial) 128-lane tile, grid=(1,).
    B = 8
    obs = jax.random.normal(k_obs, (B, STATE_DIM), jnp.float32)
    noise = jax.random.normal(k_noise, (B, ACTION_DIM), jnp.float32)
    action = jax.block_until_ready(
        gaussian_policy_forward(obs, noise, params, gate_output=False))
    ref = reference_forward(obs, noise, params, gate_output=False)
    assert action.shape == (B, ACTION_DIM)
    assert jnp.allclose(action, ref, atol=1e-5, rtol=1e-5), "mismatch (B=8)"

    # 2) Ragged batch (B=1000): multi-step pipelined grid with a masked partial
    #    final block (no wrapper padding), tanh output gate enabled.
    B2 = 1000
    k_obs2, k_noise2 = jax.random.split(jax.random.PRNGKey(1))
    obs2 = jax.random.normal(k_obs2, (B2, STATE_DIM), jnp.float32)
    noise2 = jax.random.normal(k_noise2, (B2, ACTION_DIM), jnp.float32)
    action2 = jax.block_until_ready(
        gaussian_policy_forward(obs2, noise2, params, gate_output=True))
    ref2 = reference_forward(obs2, noise2, params, gate_output=True)
    assert action2.shape == (B2, ACTION_DIM)
    assert jnp.allclose(action2, ref2, atol=1e-5, rtol=1e-5), "mismatch (B=1000)"

    # 3) bf16 HBM storage (halves DMA bytes on this bandwidth-bound kernel);
    #    f32 accumulation inside, so only bf16 rounding of operands/outputs differs.
    bf16 = jnp.bfloat16
    params_bf = tuple(p.astype(bf16) for p in params)
    obs3, noise3 = obs2.astype(bf16), noise2.astype(bf16)
    action3 = jax.block_until_ready(
        gaussian_policy_forward(obs3, noise3, params_bf, gate_output=False))
    ref3 = reference_forward(obs3, noise3, params_bf, gate_output=False)
    assert action3.dtype == bf16
    assert jnp.allclose(action3.astype(jnp.float32), ref3, atol=6e-2, rtol=6e-2), \
        "mismatch (bf16)"

    print("KERNEL_OK")
</pallas_src>

<mosaic_0001>
module attributes {stable_mosaic.version = 11 : i64} {
  func.func @gaussian_policy_kernel(%arg0: i32, %arg1: memref<128x16xf32, #tpu.memory_space<vmem>>, %arg2: memref<128x8xf32, #tpu.memory_space<vmem>>, %arg3: memref<32x16xf32, #tpu.memory_space<vmem>>, %arg4: memref<32x1xf32, #tpu.memory_space<vmem>>, %arg5: memref<8x32xf32, #tpu.memory_space<vmem>>, %arg6: memref<8x1xf32, #tpu.memory_space<vmem>>, %arg7: memref<8x1xf32, #tpu.memory_space<vmem>>, %arg8: memref<8x8xf32, #tpu.memory_space<vmem>>, %arg9: memref<8x128xf32, #tpu.memory_space<vmem>>) attributes {dimension_semantics = [#tpu.dimension_semantics<parallel>], iteration_bounds = array<i64: 1>, scalar_prefetch = 0 : i64, scratch_operands = 0 : i64, tpu.core_type = #tpu.core_type<tc>, window_params = [{transform_indices = @transform_0, window_bounds = array<i64: 128, 16>}, {transform_indices = @transform_1, window_bounds = array<i64: 128, 8>}, {pipeline_mode = #tpu.pipeline_mode<synchronous>, transform_indices = @transform_2, window_bounds = array<i64: 32, 16>}, {pipeline_mode = #tpu.pipeline_mode<synchronous>, transform_indices = @transform_3, window_bounds = array<i64: 32, 1>}, {pipeline_mode = #tpu.pipeline_mode<synchronous>, transform_indices = @transform_4, window_bounds = array<i64: 8, 32>}, {pipeline_mode = #tpu.pipeline_mode<synchronous>, transform_indices = @transform_5, window_bounds = array<i64: 8, 1>}, {pipeline_mode = #tpu.pipeline_mode<synchronous>, transform_indices = @transform_6, window_bounds = array<i64: 8, 1>}, {pipeline_mode = #tpu.pipeline_mode<synchronous>, transform_indices = @transform_7, window_bounds = array<i64: 8, 8>}, {transform_indices = @transform_8, window_bounds = array<i64: 8, 128>}]} {
    %c0 = arith.constant 0 : index
    %c0_0 = arith.constant 0 : index
    %0 = vector.load %arg1[%c0, %c0_0] : memref<128x16xf32, #tpu.memory_space<vmem>>, vector<128x16xf32>
    %c0_1 = arith.constant 0 : index
    %c0_2 = arith.constant 0 : index
    %1 = vector.load %arg2[%c0_1, %c0_2] : memref<128x8xf32, #tpu.memory_space<vmem>>, vector<128x8xf32>
    %c0_3 = arith.constant 0 : index
    %c0_4 = arith.constant 0 : index
    %2 = vector.load %arg3[%c0_3, %c0_4] : memref<32x16xf32, #tpu.memory_space<vmem>>, vector<32x16xf32>
    %c0_5 = arith.constant 0 : index
    %c0_6 = arith.constant 0 : index
    %3 = vector.load %arg5[%c0_5, %c0_6] : memref<8x32xf32, #tpu.memory_space<vmem>>, vector<8x32xf32>
    %c0_7 = arith.constant 0 : index
    %c0_8 = arith.constant 0 : index
    %4 = vector.load %arg4[%c0_7, %c0_8] : memref<32x1xf32, #tpu.memory_space<vmem>>, vector<32x1xf32>
    %c0_9 = arith.constant 0 : index
    %c0_10 = arith.constant 0 : index
    %5 = vector.load %arg6[%c0_9, %c0_10] : memref<8x1xf32, #tpu.memory_space<vmem>>, vector<8x1xf32>
    %cst = arith.constant dense<0.000000e+00> : vector<32x128xf32>
    %6 = tpu.matmul %2, %0, %cst {dimension_numbers = #tpu.dot_dimension_numbers<[1], [1], [0], [0], [0, 0, 1, 0], [], []>} : vector<32x16xf32>, vector<128x16xf32>, vector<32x128xf32> -> vector<32x128xf32>
    %7 = vector.broadcast %4 : vector<32x1xf32> to vector<32x128xf32>
    %8 = arith.addf %6, %7 : vector<32x128xf32>
    %9 = math.tanh %8 : vector<32x128xf32>
    %cst_11 = arith.constant dense<0.000000e+00> : vector<8x128xf32>
    %10 = tpu.matmul %3, %9, %cst_11 {dimension_numbers = #tpu.dot_dimension_numbers<[1], [0], [0], [1], [0, 0, 1, 1], [], []>} : vector<8x32xf32>, vector<32x128xf32>, vector<8x128xf32> -> vector<8x128xf32>
    %11 = vector.broadcast %5 : vector<8x1xf32> to vector<8x128xf32>
    %12 = arith.addf %10, %11 : vector<8x128xf32>
    %c0_12 = arith.constant 0 : index
    %c0_13 = arith.constant 0 : index
    %13 = vector.load %arg7[%c0_12, %c0_13] : memref<8x1xf32, #tpu.memory_space<vmem>>, vector<8x1xf32>
    %cst_14 = arith.constant 0.000000e+00 : f32
    %14 = vector.broadcast %cst_14 : f32 to vector<8x1xf32>
    %15 = arith.maximumf %13, %14 : vector<8x1xf32>
    %16 = vector.broadcast %cst_14 : f32 to vector<8x1xf32>
    %17 = arith.subf %13, %16 : vector<8x1xf32>
    %18 = arith.cmpf one, %17, %17 : vector<8x1xf32>
    %19 = vector.broadcast %cst_14 : f32 to vector<8x1xf32>
    %20 = arith.addf %13, %19 : vector<8x1xf32>
    %21 = math.absf %17 : vector<8x1xf32>
    %cst_15 = arith.constant 0.000000e+00 : f32
    %22 = vector.broadcast %cst_15 : f32 to vector<8x1xf32>
    %23 = arith.subf %22, %21 : vector<8x1xf32>
    %24 = math.exp %23 : vector<8x1xf32>
    %25 = math.log1p %24 : vector<8x1xf32>
    %26 = arith.addf %15, %25 : vector<8x1xf32>
    %27 = arith.select %18, %20, %26 : vector<8x1xi1>, vector<8x1xf32>
    %cst_16 = arith.constant 9.99999997E-7 : f32
    %28 = vector.broadcast %cst_16 : f32 to vector<8x1xf32>
    %29 = arith.maximumf %27, %28 : vector<8x1xf32>
    %c0_17 = arith.constant 0 : index
    %c0_18 = arith.constant 0 : index
    %30 = vector.load %arg8[%c0_17, %c0_18] : memref<8x8xf32, #tpu.memory_space<vmem>>, vector<8x8xf32>
    %31 = vector.broadcast %29 : vector<8x1xf32> to vector<8x8xf32>
    %32 = arith.mulf %30, %31 : vector<8x8xf32>
    %cst_19 = arith.constant dense<0.000000e+00> : vector<8x128xf32>
    %33 = tpu.matmul %32, %1, %cst_19 {dimension_numbers = #tpu.dot_dimension_numbers<[1], [1], [0], [0], [0, 0, 1, 0], [], []>} : vector<8x8xf32>, vector<128x8xf32>, vector<8x128xf32> -> vector<8x128xf32>
    %34 = arith.addf %12, %33 : vector<8x128xf32>
    %c0_20 = arith.constant 0 : index
    %c0_21 = arith.constant 0 : index
    %35 = vector.load %arg9[%c0_20, %c0_21] : memref<8x128xf32, #tpu.memory_space<vmem>>, vector<8x128xf32>
    tpu.vector_store %arg9[%c0_20, %c0_21], %34 {strides = array<i32>} : memref<8x128xf32, #tpu.memory_space<vmem>>, vector<8x128xf32>,
    return
  }
  func.func @transform_0(%arg0: i32) -> (i32, i32) {
    %c0_i32 = arith.constant 0 : i32
    %c0_i32_0 = arith.constant 0 : i32
    return %arg0, %c0_i32 : i32, i32
  }
  func.func @transform_1(%arg0: i32) -> (i32, i32) {
    %c0_i32 = arith.constant 0 : i32
    %c0_i32_0 = arith.constant 0 : i32
    return %arg0, %c0_i32 : i32, i32
  }
  func.func @transform_2(%arg0: i32) -> (i32, i32) {
    %c0_i32 = arith.constant 0 : i32
    %c0_i32_0 = arith.constant 0 : i32
    %c0_i32_1 = arith.constant 0 : i32
    return %c0_i32, %c0_i32_0 : i32, i32
  }
  func.func @transform_3(%arg0: i32) -> (i32, i32) {
    %c0_i32 = arith.constant 0 : i32
    %c0_i32_0 = arith.constant 0 : i32
    %c0_i32_1 = arith.constant 0 : i32
    return %c0_i32, %c0_i32_0 : i32, i32
  }
  func.func @transform_4(%arg0: i32) -> (i32, i32) {
    %c0_i32 = arith.constant 0 : i32
    %c0_i32_0 = arith.constant 0 : i32
    %c0_i32_1 = arith.constant 0 : i32
    return %c0_i32, %c0_i32_0 : i32, i32
  }
  func.func @transform_5(%arg0: i32) -> (i32, i32) {
    %c0_i32 = arith.constant 0 : i32
    %c0_i32_0 = arith.constant 0 : i32
    %c0_i32_1 = arith.constant 0 : i32
    return %c0_i32, %c0_i32_0 : i32, i32
  }
  func.func @transform_6(%arg0: i32) -> (i32, i32) {
    %c0_i32 = arith.constant 0 : i32
    %c0_i32_0 = arith.constant 0 : i32
    %c0_i32_1 = arith.constant 0 : i32
    return %c0_i32, %c0_i32_0 : i32, i32
  }
  func.func @transform_7(%arg0: i32) -> (i32, i32) {
    %c0_i32 = arith.constant 0 : i32
    %c0_i32_0 = arith.constant 0 : i32
    %c0_i32_1 = arith.constant 0 : i32
    return %c0_i32, %c0_i32_0 : i32, i32
  }
  func.func @transform_8(%arg0: i32) -> (i32, i32) {
    %c0_i32 = arith.constant 0 : i32
    %c0_i32_0 = arith.constant 0 : i32
    return %c0_i32, %arg0 : i32, i32
  }
}

</mosaic_0001>

<llo_original>
// kernel: tpu_custom_call.1
$region0: #{tpu_custom_call.1}
  #allocation0 [shape = 'u32[]', space=smem, size = 0x4, offset = 0x4, fixed_abs, tag = 'smem constant byte address 0x4 - core index']
  #allocation1 [shape = 'u32[144,128]{1,0:T(1,128)}', space=vmem, size = 0x12000, scoped, tag = 'internal scratch']
  %s0 = inlined_call_operand.vmem [shape: f32[8,16], index: 0, kind: input, shape index: {}]
  %s1 = inlined_call_operand.vmem [shape: f32[8,8], index: 1, kind: input, shape index: {}]
  %s2 = inlined_call_operand.vmem [shape: f32[32,16], index: 2, kind: input, shape index: {}]
  %s3 = inlined_call_operand.vmem [shape: f32[32,1], index: 3, kind: input, shape index: {}]
  %s4 = inlined_call_operand.vmem [shape: f32[8,32], index: 4, kind: input, shape index: {}]
  %s5 = inlined_call_operand.vmem [shape: f32[8,1], index: 5, kind: input, shape index: {}]
  %s6 = inlined_call_operand.vmem [shape: f32[8,1], index: 6, kind: input, shape index: {}]
  %s7 = inlined_call_operand.vmem [shape: f32[8,8], index: 7, kind: input, shape index: {}]
  %s8 = inlined_call_operand.hbm [shape: f32[8,8], index: 8, kind: output, shape index: {}]
  %s9 = sld [smem:[#allocation0]]
  $region42: #{tpu_custom_call.1} parent=0
    _
  %s11 = ssub.s32 1, %s9
  %s12 = scalar_select 0, %s11, %s9
  $region1: #{tpu_custom_call.1} parent=0
    #allocation2 [shape = 'u8[4096]{0}', space=vmem, size = 0x1000, scoped, tag = 'output window, operand 0, single buffered']
    #allocation3 [shape = 's32[1]{0}', space=sflag, size = 0x4, scoped, tag = 'scoped memory for tpu_custom_call.1']
    %13 = vsyncpa [#allocation3], 0
    // Predicated region
    $region2: #{tpu_custom_call.1} parent=1 // pred_check
      _
    $region3: #{tpu_custom_call.1} parent=1 // pred_check_branch
      %15 = sbr.rel (0) target = $region5
    $region4: #{tpu_custom_call.1} parent=1 // pred_region
      _
    $region5: #{tpu_custom_call.1} parent=1 // pred_fallthru
      _
    // Predicated region
    $region6: #{tpu_custom_call.1} parent=1 // pred_check
      _
    $region7: #{tpu_custom_call.1} parent=1 // pred_check_branch
      %17 = sbr.rel (0) target = $region9
    $region8: #{tpu_custom_call.1} parent=1 // pred_region
      _
    $region9: #{tpu_custom_call.1} parent=1 // pred_fallthru
      _
    // Predicated region
    $region10: #{tpu_custom_call.1} parent=1 // pred_check
      _
    $region11: #{tpu_custom_call.1} parent=1 // pred_check_branch
      %19 = sbr.rel (0) target = $region13
    $region12: #{tpu_custom_call.1} parent=1 // pred_region
      _
    $region13: #{tpu_custom_call.1} parent=1 // pred_fallthru
      _
    // Predicated region
    $region14: #{tpu_custom_call.1} parent=1 // pred_check
      _
    $region15: #{tpu_custom_call.1} parent=1 // pred_check_branch
      %21 = sbr.rel (0) target = $region17
    $region16: #{tpu_custom_call.1} parent=1 // pred_region
      _
    $region17: #{tpu_custom_call.1} parent=1 // pred_fallthru
      _
    // Predicated region
    $region18: #{tpu_custom_call.1} parent=1 // pred_check
      _
    $region19: #{tpu_custom_call.1} parent=1 // pred_check_branch
      %23 = sbr.rel (0) target = $region21
    $region20: #{tpu_custom_call.1} parent=1 // pred_region
      _
    $region21: #{tpu_custom_call.1} parent=1 // pred_fallthru
      _
    // Predicated region
    $region22: #{tpu_custom_call.1} parent=1 // pred_check
      _
    $region23: #{tpu_custom_call.1} parent=1 // pred_check_branch
      %25 = sbr.rel (0) target = $region25
    $region24: #{tpu_custom_call.1} parent=1 // pred_region
      _
    $region25: #{tpu_custom_call.1} parent=1 // pred_fallthru
      _
    // Predicated region
    $region26: #{tpu_custom_call.1} parent=1 // pred_check
      _
    $region27: #{tpu_custom_call.1} parent=1 // pred_check_branch
      %27 = sbr.rel (0) target = $region29
    $region28: #{tpu_custom_call.1} parent=1 // pred_region
      _
    $region29: #{tpu_custom_call.1} parent=1 // pred_fallthru
      _
    // Predicated region
    $region30: #{tpu_custom_call.1} parent=1 // pred_check
      _
    $region31: #{tpu_custom_call.1} parent=1 // pred_check_branch
      %29 = sbr.rel (0) target = $region33
    $region32: #{tpu_custom_call.1} parent=1 // pred_region
      _
    $region33: #{tpu_custom_call.1} parent=1 // pred_fallthru
      _
    %v30 = vld [vmem:[%s0] sm:$0xff]
    %v31 = vld [vmem:[%s0 + $0x8] sm:$0xff]
    %v32 = vld [vmem:[%s0 + $0x10] sm:$0xff]
    %v33 = vld [vmem:[%s0 + $0x18] sm:$0xff]
    %v34 = vld [vmem:[%s0 + $0x20] sm:$0xff]
    %v35 = vld [vmem:[%s0 + $0x28] sm:$0xff]
    %v36 = vld [vmem:[%s0 + $0x30] sm:$0xff]
    %v37 = vld [vmem:[%s0 + $0x38] sm:$0xff]
    %v38 = vld [vmem:[%s0 + $0x40] sm:$0xff]
    %v39 = vld [vmem:[%s0 + $0x48] sm:$0xff]
    %v40 = vld [vmem:[%s0 + $0x50] sm:$0xff]
    %v41 = vld [vmem:[%s0 + $0x58] sm:$0xff]
    %v42 = vld [vmem:[%s0 + $0x60] sm:$0xff]
    %v43 = vld [vmem:[%s0 + $0x68] sm:$0xff]
    %v44 = vld [vmem:[%s0 + $0x70] sm:$0xff]
    %v45 = vld [vmem:[%s0 + $0x78] sm:$0xff]
    %v46 = vld [vmem:[%s1] sm:$0xff]
    %v47 = vld [vmem:[%s1 + $0x8] sm:$0xff]
    %v48 = vld [vmem:[%s1 + $0x10] sm:$0xff]
    %v49 = vld [vmem:[%s1 + $0x18] sm:$0xff]
    %v50 = vld [vmem:[%s1 + $0x20] sm:$0xff]
    %v51 = vld [vmem:[%s1 + $0x28] sm:$0xff]
    %v52 = vld [vmem:[%s1 + $0x30] sm:$0xff]
    %v53 = vld [vmem:[%s1 + $0x38] sm:$0xff]
    %v54 = vld [vmem:[%s1 + $0x40] sm:$0xff]
    %v55 = vld [vmem:[%s1 + $0x48] sm:$0xff]
    %v56 = vld [vmem:[%s1 + $0x50] sm:$0xff]
    %v57 = vld [vmem:[%s1 + $0x58] sm:$0xff]
    %v58 = vld [vmem:[%s1 + $0x60] sm:$0xff]
    %v59 = vld [vmem:[%s1 + $0x68] sm:$0xff]
    %v60 = vld [vmem:[%s1 + $0x70] sm:$0xff]
    %v61 = vld [vmem:[%s1 + $0x78] sm:$0xff]
    %v62 = vld [vmem:[%s2] sm:$0xff]
    %v63 = vld [vmem:[%s2 + $0x8] sm:$0xff]
    %v64 = vld [vmem:[%s2 + $0x10] sm:$0xff]
    %v65 = vld [vmem:[%s2 + $0x18] sm:$0xff]
    %v66 = vld [vmem:[%s4] sm:$0xff]
    %v67 = vld [vmem:[%s3] sm:$0xff]
    %v68 = vld [vmem:[%s3 + $0x8] sm:$0xff]
    %v69 = vld [vmem:[%s3 + $0x10] sm:$0xff]
    %v70 = vld [vmem:[%s3 + $0x18] sm:$0xff]
    %v71 = vld [vmem:[%s5] sm:$0xff]
    %73 = vset.pattern.permute.xlu0 0
    %74 = vperm.xlu0 %73, %v67
    %v75 = vpop.permute.xlu0 %74
    %78 = vset.pattern.permute.xlu0 0
    %79 = vperm.xlu0 %78, %v68
    %v80 = vpop.permute.xlu0 %79
    %83 = vset.pattern.permute.xlu0 0
    %84 = vperm.xlu0 %83, %v69
    %v85 = vpop.permute.xlu0 %84
    %88 = vset.pattern.permute.xlu0 0
    %89 = vperm.xlu0 %88, %v70
    %v90 = vpop.permute.xlu0 %89
    %vm92 = vcmask 130048
    %v94 = vsel %vm92, %v62, 0
    %v97 = vsel %vm92, %v63, 0
    %v100 = vsel %vm92, %v64, 0
    %v103 = vsel %vm92, %v65, 0
    %v106 = vsel %vm92, %v30, 0
    %v109 = vsel %vm92, %v31, 0
    %v112 = vsel %vm92, %v32, 0
    %v115 = vsel %vm92, %v33, 0
    %v118 = vsel %vm92, %v34, 0
    %v121 = vsel %vm92, %v35, 0
    %v124 = vsel %vm92, %v36, 0
    %v127 = vsel %vm92, %v37, 0
    %v130 = vsel %vm92, %v38, 0
    %v133 = vsel %vm92, %v39, 0
    %v136 = vsel %vm92, %v40, 0
    %v139 = vsel %vm92, %v41, 0
    %v142 = vsel %vm92, %v42, 0
    %v145 = vsel %vm92, %v43, 0
    %v148 = vsel %vm92, %v44, 0
    %v151 = vsel %vm92, %v45, 0
    %153 = vmatprep.subr.mxu0 0.0
    %154 = vmatpush1.xpose.msra.mxu0 %v106
    %155 = vmatprep.subr.mxu0 0.0
    %156 = vmatpush1.xpose.msra.mxu0 %v109
    %157 = vmatprep.subr.mxu0 0.0
    %158 = vmatpush1.xpose.msra.mxu0 %v112
    %159 = vmatprep.subr.mxu0 0.0
    %160 = vmatpush1.xpose.msra.mxu0 %v115
    %161 = vmatprep.subr.mxu0 0.0
    %162 = vmatpush1.xpose.msra.mxu0 %v118
    %163 = vmatprep.subr.mxu0 0.0
    %164 = vmatpush1.xpose.msra.mxu0 %v121
    %165 = vmatprep.subr.mxu0 0.0
    %166 = vmatpush1.xpose.msra.mxu0 %v124
    %167 = vmatprep.subr.mxu0 0.0
    %168 = vmatpush1.xpose.msra.mxu0 %v127
    %169 = vmatprep.subr.mxu0 0.0
    %170 = vmatpush1.xpose.msra.mxu0 %v130
    %171 = vmatprep.subr.mxu0 0.0
    %172 = vmatpush1.xpose.msra.mxu0 %v133
    %173 = vmatprep.subr.mxu0 0.0
    %174 = vmatpush1.xpose.msra.mxu0 %v136
    %175 = vmatprep.subr.mxu0 0.0
    %176 = vmatpush1.xpose.msra.mxu0 %v139
    %177 = vmatprep.subr.mxu0 0.0
    %178 = vmatpush1.xpose.msra.mxu0 %v142
    %179 = vmatprep.subr.mxu0 0.0
    %180 = vmatpush1.xpose.msra.mxu0 %v145
    %181 = vmatprep.subr.mxu0 0.0
    %182 = vmatpush1.xpose.msra.mxu0 %v148
    %183 = vmatprep.subr.mxu0 0.0
    %184 = vmatpush1.xpose.msra.mxu0 %v151
    %185 = vmatprep.subr.mxu0 0.0
    %186 = vmatpush1.xpose.msra.mxu0 0.0
    %187 = vmatprep.subr.mxu0 0.0
    %188 = vmatpush1.xpose.msra.mxu0 0.0
    %189 = vmatprep.subr.mxu0 0.0
    %190 = vmatpush1.xpose.msra.mxu0 0.0
    %191 = vmatprep.subr.mxu0 0.0
    %192 = vmatpush1.xpose.msra.mxu0 0.0
    %193 = vmatprep.subr.mxu0 0.0
    %194 = vmatpush1.xpose.msra.mxu0 0.0
    %195 = vmatprep.subr.mxu0 0.0
    %196 = vmatpush1.xpose.msra.mxu0 0.0
    %197 = vmatprep.subr.mxu0 0.0
    %198 = vmatpush1.xpose.msra.mxu0 0.0
    %199 = vmatprep.subr.mxu0 0.0
    %200 = vmatpush1.xpose.msra.mxu0 0.0
    %201 = vmatprep.subr.mxu0 0.0
    %202 = vmatpush1.xpose.msra.mxu0 0.0
    %203 = vmatprep.subr.mxu0 0.0
    %204 = vmatpush1.xpose.msra.mxu0 0.0
    %205 = vmatprep.subr.mxu0 0.0
    %206 = vmatpush1.xpose.msra.mxu0 0.0
    %207 = vmatprep.subr.mxu0 0.0
    %208 = vmatpush1.xpose.msra.mxu0 0.0
    %209 = vmatprep.subr.mxu0 0.0
    %210 = vmatpush1.xpose.msra.mxu0 0.0
    %211 = vmatprep.subr.mxu0 0.0
    %212 = vmatpush1.xpose.msra.mxu0 0.0
    %213 = vmatprep.subr.mxu0 0.0
    %214 = vmatpush1.xpose.msra.mxu0 0.0
    %215 = vmatprep.subr.mxu0 0.0
    %216 = vmatpush1.xpose.msra.mxu0 0.0
    %217 = vmatprep.mubr.f32.mxu0 0.0
    %218 = vmatmul.mubr.f32.gmra.mrb[0].mxu0 %v94
    %v219 = vpop.f32.mrb[0].mxu0
    %v220 = vadd.f32 %v75, %v219
    %v221 = vpop.f32.mrb[0].mxu0
    %222 = vmatprep.mubr.f32.mxu0 0.0
    %223 = vmatmul.mubr.f32.gmra.mrb[0].mxu0 %v97
    %v224 = vpop.f32.mrb[0].mxu0
    %v225 = vadd.f32 %v80, %v224
    %v226 = vpop.f32.mrb[0].mxu0
    %227 = vmatprep.mubr.f32.mxu0 0.0
    %228 = vmatmul.mubr.f32.gmra.mrb[0].mxu0 %v100
    %v229 = vpop.f32.mrb[0].mxu0
    %v230 = vadd.f32 %v85, %v229
    %v231 = vpop.f32.mrb[0].mxu0
    %232 = vmatprep.mubr.f32.mxu0 0.0
    %233 = vmatmul.mubr.f32.gmra.mrb[0].mxu0 %v103
    %v234 = vpop.f32.mrb[0].mxu0
    %v235 = vadd.f32 %v90, %v234
    %v236 = vpop.f32.mrb[0].mxu0
    %237 = vdwg.mxu0
    %v238 = vtanh.pop %v220
    %v239 = vtanh.pop %v225
    %v240 = vtanh.pop %v230
    %v241 = vtanh.pop %v235
    %243 = vset.pattern.permute.xlu0 0
    %244 = vperm.xlu0 %243, %v71
    %v245 = vpop.permute.xlu0 %244
    %vm247 = vcmask 261120
    %v249 = vsel %vm247, %v66, 0
    %251 = vmatprep.subr.mxu0 0.0
    %252 = vmatpush1.msra.mxu0 %v238
    %253 = vmatprep.subr.mxu0 0.0
    %254 = vmatpush1.msra.mxu0 %v239
    %255 = vmatprep.subr.mxu0 0.0
    %256 = vmatpush1.msra.mxu0 %v240
    %257 = vmatprep.subr.mxu0 0.0
    %258 = vmatpush1.msra.mxu0 %v241
    %259 = vmatprep.subr.mxu0 0.0
    %260 = vmatpush1.msra.mxu0 0.0
    %261 = vmatprep.subr.mxu0 0.0
    %262 = vmatpush1.msra.mxu0 0.0
    %263 = vmatprep.subr.mxu0 0.0
    %264 = vmatpush1.msra.mxu0 0.0
    %265 = vmatprep.subr.mxu0 0.0
    %266 = vmatpush1.msra.mxu0 0.0
    %267 = vmatprep.subr.mxu0 0.0
    %268 = vmatpush1.msra.mxu0 0.0
    %269 = vmatprep.subr.mxu0 0.0
    %270 = vmatpush1.msra.mxu0 0.0
    %271 = vmatprep.subr.mxu0 0.0
    %272 = vmatpush1.msra.mxu0 0.0
    %273 = vmatprep.subr.mxu0 0.0
    %274 = vmatpush1.msra.mxu0 0.0
    %275 = vmatprep.subr.mxu0 0.0
    %276 = vmatpush1.msra.mxu0 0.0
    %277 = vmatprep.subr.mxu0 0.0
    %278 = vmatpush1.msra.mxu0 0.0
    %279 = vmatprep.subr.mxu0 0.0
    %280 = vmatpush1.msra.mxu0 0.0
    %281 = vmatprep.subr.mxu0 0.0
    %282 = vmatpush1.msra.mxu0 0.0
    %283 = vmatprep.subr.mxu0 0.0
    %284 = vmatpush1.msra.mxu0 0.0
    %285 = vmatprep.subr.mxu0 0.0
    %286 = vmatpush1.msra.mxu0 0.0
    %287 = vmatprep.subr.mxu0 0.0
    %288 = vmatpush1.msra.mxu0 0.0
    %289 = vmatprep.subr.mxu0 0.0
    %290 = vmatpush1.msra.mxu0 0.0
    %291 = vmatprep.subr.mxu0 0.0
    %292 = vmatpush1.msra.mxu0 0.0
    %293 = vmatprep.subr.mxu0 0.0
    %294 = vmatpush1.msra.mxu0 0.0
    %295 = vmatprep.subr.mxu0 0.0
    %296 = vmatpush1.msra.mxu0 0.0
    %297 = vmatprep.subr.mxu0 0.0
    %298 = vmatpush1.msra.mxu0 0.0
    %299 = vmatprep.subr.mxu0 0.0
    %300 = vmatpush1.msra.mxu0 0.0
    %301 = vmatprep.subr.mxu0 0.0
    %302 = vmatpush1.msra.mxu0 0.0
    %303 = vmatprep.subr.mxu0 0.0
    %304 = vmatpush1.msra.mxu0 0.0
    %305 = vmatprep.subr.mxu0 0.0
    %306 = vmatpush1.msra.mxu0 0.0
    %307 = vmatprep.subr.mxu0 0.0
    %308 = vmatpush1.msra.mxu0 0.0
    %309 = vmatprep.subr.mxu0 0.0
    %310 = vmatpush1.msra.mxu0 0.0
    %311 = vmatprep.subr.mxu0 0.0
    %312 = vmatpush1.msra.mxu0 0.0
    %313 = vmatprep.subr.mxu0 0.0
    %314 = vmatpush1.msra.mxu0 0.0
    %315 = vmatprep.mubr.f32.mxu0 0.0
    %316 = vmatmul.mubr.f32.gmra.mrb[0].mxu0 %v249
    %v317 = vpop.f32.mrb[0].mxu0
    %v318 = vadd.f32 %v245, %v317
    %v319 = vpop.f32.mrb[0].mxu0
    %320 = vdwg.mxu0
    %v321 = vld [vmem:[%s6] sm:$0xff]
    %v322 = vmax.f32 %v321, 0.0
    %vm323 = vcmp.ne.f32.partialorder %v321, %v321
    %v324 = vadd.f32 %v321, 0.0
    %v325 = vand.u32 2147483647, %v321
    %v326 = vsub.f32 0.0, %v325
    %v327 = vmul.f32 %v326, 1.442695
    %v328 = vpow.pop %v327
    %v329 = vadd.f32 %v328, 1.0
    %v330 = vlog2.pop %v329
    %v331 = vmul.f32 %v330, 0.6931472
    %v332 = vmul.f32 -0.5, %v328
    %v333 = vadd.f32 %v332, 1.0
    %v334 = vmul.f32 %v333, %v328
    %v335 = vand.u32 2147483647, %v328
    %vm336 = vcmp.lt.f32.partialorder %v335, 0.0004427343
    %v337 = vsel %vm336, %v334, %v331
    %v338 = vadd.f32 %v322, %v337
    %v339 = vsel %vm323, %v324, %v338
    %v340 = vmax.f32 %v339, 1e-06
    %v341 = vld [vmem:[%s7] sm:$0xff]
    %343 = vset.pattern.permute.xlu0 0
    %344 = vperm.xlu0 %343, %v340
    %v345 = vpop.permute.xlu0 %344
    %v347 = vmul.f32 %v341, %v345
    %vm348 = vcmask 64512
    %v350 = vsel %vm348, %v347, 0
    %v353 = vsel %vm348, %v46, 0
    %v356 = vsel %vm348, %v47, 0
    %v359 = vsel %vm348, %v48, 0
    %v362 = vsel %vm348, %v49, 0
    %v365 = vsel %vm348, %v50, 0
    %v368 = vsel %vm348, %v51, 0
    %v371 = vsel %vm348, %v52, 0
    %v374 = vsel %vm348, %v53, 0
    %v377 = vsel %vm348, %v54, 0
    %v380 = vsel %vm348, %v55, 0
    %v383 = vsel %vm348, %v56, 0
    %v386 = vsel %vm348, %v57, 0
    %v389 = vsel %vm348, %v58, 0
    %v392 = vsel %vm348, %v59, 0
    %v395 = vsel %vm348, %v60, 0
    %v398 = vsel %vm348, %v61, 0
    %400 = vmatprep.subr.mxu0 0.0
    %401 = vmatpush1.xpose.msra.mxu0 %v353
    %402 = vmatprep.subr.mxu0 0.0
    %403 = vmatpush1.xpose.msra.mxu0 %v356
    %404 = vmatprep.subr.mxu0 0.0
    %405 = vmatpush1.xpose.msra.mxu0 %v359
    %406 = vmatprep.subr.mxu0 0.0
    %407 = vmatpush1.xpose.msra.mxu0 %v362
    %408 = vmatprep.subr.mxu0 0.0
    %409 = vmatpush1.xpose.msra.mxu0 %v365
    %410 = vmatprep.subr.mxu0 0.0
    %411 = vmatpush1.xpose.msra.mxu0 %v368
    %412 = vmatprep.subr.mxu0 0.0
    %413 = vmatpush1.xpose.msra.mxu0 %v371
    %414 = vmatprep.subr.mxu0 0.0
    %415 = vmatpush1.xpose.msra.mxu0 %v374
    %416 = vmatprep.subr.mxu0 0.0
    %417 = vmatpush1.xpose.msra.mxu0 %v377
    %418 = vmatprep.subr.mxu0 0.0
    %419 = vmatpush1.xpose.msra.mxu0 %v380
    %420 = vmatprep.subr.mxu0 0.0
    %421 = vmatpush1.xpose.msra.mxu0 %v383
    %422 = vmatprep.subr.mxu0 0.0
    %423 = vmatpush1.xpose.msra.mxu0 %v386
    %424 = vmatprep.subr.mxu0 0.0
    %425 = vmatpush1.xpose.msra.mxu0 %v389
    %426 = vmatprep.subr.mxu0 0.0
    %427 = vmatpush1.xpose.msra.mxu0 %v392
    %428 = vmatprep.subr.mxu0 0.0
    %429 = vmatpush1.xpose.msra.mxu0 %v395
    %430 = vmatprep.subr.mxu0 0.0
    %431 = vmatpush1.xpose.msra.mxu0 %v398
    %432 = vmatprep.subr.mxu0 0.0
    %433 = vmatpush1.xpose.msra.mxu0 0.0
    %434 = vmatprep.subr.mxu0 0.0
    %435 = vmatpush1.xpose.msra.mxu0 0.0
    %436 = vmatprep.subr.mxu0 0.0
    %437 = vmatpush1.xpose.msra.mxu0 0.0
    %438 = vmatprep.subr.mxu0 0.0
    %439 = vmatpush1.xpose.msra.mxu0 0.0
    %440 = vmatprep.subr.mxu0 0.0
    %441 = vmatpush1.xpose.msra.mxu0 0.0
    %442 = vmatprep.subr.mxu0 0.0
    %443 = vmatpush1.xpose.msra.mxu0 0.0
    %444 = vmatprep.subr.mxu0 0.0
    %445 = vmatpush1.xpose.msra.mxu0 0.0
    %446 = vmatprep.subr.mxu0 0.0
    %447 = vmatpush1.xpose.msra.mxu0 0.0
    %448 = vmatprep.subr.mxu0 0.0
    %449 = vmatpush1.xpose.msra.mxu0 0.0
    %450 = vmatprep.subr.mxu0 0.0
    %451 = vmatpush1.xpose.msra.mxu0 0.0
    %452 = vmatprep.subr.mxu0 0.0
    %453 = vmatpush1.xpose.msra.mxu0 0.0
    %454 = vmatprep.subr.mxu0 0.0
    %455 = vmatpush1.xpose.msra.mxu0 0.0
    %456 = vmatprep.subr.mxu0 0.0
    %457 = vmatpush1.xpose.msra.mxu0 0.0
    %458 = vmatprep.subr.mxu0 0.0
    %459 = vmatpush1.xpose.msra.mxu0 0.0
    %460 = vmatprep.subr.mxu0 0.0
    %461 = vmatpush1.xpose.msra.mxu0 0.0
    %462 = vmatprep.subr.mxu0 0.0
    %463 = vmatpush1.xpose.msra.mxu0 0.0
    %464 = vmatprep.mubr.f32.mxu0 0.0
    %465 = vmatmul.mubr.f32.gmra.mrb[0].mxu0 %v350
    %v466 = vpop.f32.mrb[0].mxu0
    %v467 = vadd.f32 0.0, %v466
    %v468 = vpop.f32.mrb[0].mxu0
    %469 = vdwg.mxu0
    %v470 = vadd.f32 %v318, %v467
    %471 = vst [vmem:[#allocation2] sm:$0xff] %v470
    // Predicated region
    $region34: #{tpu_custom_call.1} parent=1 // pred_check
      _
    $region35: #{tpu_custom_call.1} parent=1 // pred_check_branch
      %473 = sbr.rel (0) target = $region37
    $region36: #{tpu_custom_call.1} parent=1 // pred_region
      %s475 = ssub.s32 128, 128
      %476 = vsyncadd [#allocation3], %s475
      %s478 = sshll.u32 [#allocation2], 4
      %s479 = int_to_ptr.vmem [resolvable:$true] %s478
      %481 = dma.vmem_to_hbm [thread:$0]  %s479, 128, %s8, [#allocation3]
    $region37: #{tpu_custom_call.1} parent=1 // pred_fallthru
      _
    // Predicated region
    $region38: #{tpu_custom_call.1} parent=1 // pred_check
      _
    $region39: #{tpu_custom_call.1} parent=1 // pred_check_branch
      %483 = sbr.rel (0) target = $region41
    $region40: #{tpu_custom_call.1} parent=1 // pred_region
      %484 = dma.done [#allocation3], 128
    $region41: #{tpu_custom_call.1} parent=1 // pred_fallthru
      _
    %485 = vsyncpa [#allocation3], 1

</llo_original>
